<compile_context>
chip_gen: v5e
topology: v5e:2x2
jax: 0.10.0
libtpu: 0.0.40
codegen_flags: <defaults>
</compile_context>

<pallas_src>
import functools

import jax
import jax.numpy as jnp
from jax import lax
from jax.experimental import pallas as pl
from jax.experimental.pallas import tpu as pltpu

LANES = 128
SUBLANES = 8
ROW_ALIGN = 16                 # multiple of 16 rows: clean for f32 (8) and bf16 (16) packing
GROUP_ROWS = 256               # strip-mine unit: (256,128) f32 = 32 vregs per operand
TARGET_TILE_BYTES = 4 << 20    # ~4 MiB per input tile (per perf review)
VMEM_LIMIT_BYTES = 32 << 20    # covers 2 inputs x 2 buffers x 4 MiB + headroom on v5e/v6e/v7x


def _round_up(x: int, m: int) -> int:
    return ((x + m - 1) // m) * m


def _rmse_partial_kernel(yhat_ref, y_ref, out_ref, *,
                         tile_rows, group_rows, n_rows, needs_mask):
    """Partial sum of squared differences for one (tile_rows, 128) block.

    Writes one (8, 128) f32 vreg of partial sums (pure VPU adds; the tiny
    cross-lane reduction is finished in plain JAX afterwards).
    """
    num_groups = tile_rows // group_rows

    def group_partial(g, masked):
        start = pl.multiple_of(g * group_rows, group_rows)
        a = yhat_ref[pl.ds(start, group_rows), :].astype(jnp.float32)
        b = y_ref[pl.ds(start, group_rows), :].astype(jnp.float32)
        d = a - b
        sq = d * d
        if masked:
            # Rows past the real end of the array (partial last block) hold
            # unspecified VMEM contents -> select 0 for them.
            row = (lax.broadcasted_iota(jnp.int32, sq.shape, 0)
                   + pl.program_id(0) * tile_rows + g * group_rows)
            sq = jnp.where(row < n_rows, sq, 0.0)
        # (group_rows,128) -> (group_rows//8, 8, 128): layout-preserving split
        # of the sublane axis; sum over axis 0 is vreg adds only (no XLU).
        return sq.reshape(-1, SUBLANES, LANES).sum(axis=0)

    def reduce_block(masked):
        def body(g, acc):
            return acc + group_partial(g, masked)
        out_ref[0] = lax.fori_loop(
            0, num_groups, body, jnp.zeros((SUBLANES, LANES), jnp.float32))

    if needs_mask:
        # Only the last block pays the row mask; all other blocks run the
        # unmasked hot path.
        is_last = pl.program_id(0) == pl.num_programs(0) - 1

        @pl.when(is_last)
        def _():
            reduce_block(True)

        @pl.when(jnp.logical_not(is_last))
        def _():
            reduce_block(False)
    else:
        reduce_block(False)


def rmse_loss(yhat: jax.Array, y: jax.Array) -> jax.Array:
    """sqrt(mean((yhat - y) ** 2)) over all elements (matches nn.MSELoss + sqrt)."""
    assert yhat.shape == y.shape, "RMSELoss requires matching shapes"
    n_elems = yhat.size

    yhat_flat = yhat.reshape(-1)
    y_flat = y.reshape(-1)

    rows = n_elems // LANES
    n_aligned = rows * LANES

    # <128-element ragged lane tail: folded into the tiny JAX finishing sum
    # instead of jnp.pad-ing both inputs (which costs a full extra HBM pass).
    tail_sum = jnp.float32(0.0)
    if n_aligned != n_elems:
        dt = (yhat_flat[n_aligned:].astype(jnp.float32)
              - y_flat[n_aligned:].astype(jnp.float32))
        tail_sum = jnp.sum(dt * dt, dtype=jnp.float32)

    if rows == 0:
        total = tail_sum
    else:
        if n_aligned != n_elems:
            yhat_flat = yhat_flat[:n_aligned]
            y_flat = y_flat[:n_aligned]
        yhat_2d = yhat_flat.reshape(rows, LANES)
        y_2d = y_flat.reshape(rows, LANES)

        # Tile sized in BYTES (~4 MiB per input) so bf16 callers keep the same
        # HBM bytes per grid step; rows kept a multiple of 16 for packing.
        itemsize = jnp.dtype(yhat.dtype).itemsize
        max_tile_rows = max(ROW_ALIGN, TARGET_TILE_BYTES // (LANES * itemsize))
        tile_rows = min(max_tile_rows, _round_up(rows, ROW_ALIGN))
        group_rows = min(GROUP_ROWS, tile_rows)
        tile_rows = _round_up(tile_rows, group_rows)  # groups divide the tile

        num_blocks = pl.cdiv(rows, tile_rows)
        needs_mask = (rows % tile_rows) != 0

        partials = pl.pallas_call(
            functools.partial(
                _rmse_partial_kernel,
                tile_rows=tile_rows,
                group_rows=group_rows,
                n_rows=rows,
                needs_mask=needs_mask,
            ),
            out_shape=jax.ShapeDtypeStruct((num_blocks, SUBLANES, LANES), jnp.float32),
            grid_spec=pltpu.PrefetchScalarGridSpec(
                num_scalar_prefetch=0,
                grid=(num_blocks,),
                in_specs=[
                    pl.BlockSpec((tile_rows, LANES), lambda i: (i, 0)),
                    pl.BlockSpec((tile_rows, LANES), lambda i: (i, 0)),
                ],
                out_specs=pl.BlockSpec((1, SUBLANES, LANES), lambda i: (i, 0, 0)),
            ),
            compiler_params=pltpu.CompilerParams(
                # Independent per-block partials: "parallel" lets v7x shard the
                # grid over both TensorCores (near-neutral on v5e/v6e).
                dimension_semantics=("parallel",),
                # 2 inputs x 2 pipeline buffers x ~4 MiB tiles = ~16 MiB, which
                # exceeds v5e's 16 MiB scoped default; raise explicitly (still
                # well under v7x's 64 MiB physical VMEM).
                vmem_limit_bytes=VMEM_LIMIT_BYTES,
            ),
        )(yhat_2d, y_2d)

        # Tiny finishing reduction (num_blocks * 1024 f32) + sqrt in plain JAX.
        total = jnp.sum(partials, dtype=jnp.float32) + tail_sum

    return jnp.sqrt(total / jnp.float32(n_elems))


if __name__ == "__main__":
    key = jax.random.PRNGKey(0)
    k1, k2 = jax.random.split(key)

    # Small NCHW-shaped predictions / targets, like a conv-net regression head.
    shape = (2, 4, 16, 16)
    yhat = jax.random.normal(k1, shape, dtype=jnp.float32)
    y = jax.random.normal(k2, shape, dtype=jnp.float32)

    loss = rmse_loss(yhat, y)
    loss = jax.block_until_ready(loss)

    # Reference check against plain JAX.
    ref = jnp.sqrt(jnp.mean((yhat - y) ** 2))
    assert jnp.allclose(loss, ref, rtol=1e-5, atol=1e-6), (loss, ref)

    print("KERNEL_OK")
</pallas_src>

<mosaic_0001>
module attributes {stable_mosaic.version = 11 : i64} {
  func.func @_rmse_partial_kernel(%arg0: i32, %arg1: memref<16x128xf32, #tpu.memory_space<vmem>>, %arg2: memref<16x128xf32, #tpu.memory_space<vmem>>, %arg3: memref<1x8x128xf32, #tpu.memory_space<vmem>>) attributes {dimension_semantics = [#tpu.dimension_semantics<parallel>], iteration_bounds = array<i64: 1>, scalar_prefetch = 0 : i64, scratch_operands = 0 : i64, tpu.core_type = #tpu.core_type<tc>, window_params = [{transform_indices = @transform_0, window_bounds = array<i64: 16, 128>}, {transform_indices = @transform_1, window_bounds = array<i64: 16, 128>}, {transform_indices = @transform_2, window_bounds = array<i64: 1, 8, 128>}]} {
    %cst = arith.constant 0.000000e+00 : f32
    %0 = vector.broadcast %cst : f32 to vector<8x128xf32>
    %c0_i32 = arith.constant 0 : i32
    %c16_i32 = arith.constant 16 : i32
    %1 = arith.muli %c0_i32, %c16_i32 : i32
    %2 = tpu.assume_multiple %1, 16 : i32
    %3 = arith.index_cast %2 : i32 to index
    %c0 = arith.constant 0 : index
    %4 = vector.load %arg1[%3, %c0] : memref<16x128xf32, #tpu.memory_space<vmem>>, vector<16x128xf32>
    %5 = arith.index_cast %2 : i32 to index
    %c0_0 = arith.constant 0 : index
    %6 = vector.load %arg2[%5, %c0_0] : memref<16x128xf32, #tpu.memory_space<vmem>>, vector<16x128xf32>
    %7 = arith.subf %4, %6 : vector<16x128xf32>
    %8 = arith.mulf %7, %7 : vector<16x128xf32>
    %9 = vector.shape_cast %8 : vector<16x128xf32> to vector<2x8x128xf32>
    %cst_1 = arith.constant dense<0.000000e+00> : vector<8x128xf32>
    %10 = vector.multi_reduction <add>, %9, %cst_1 [0] : vector<2x8x128xf32> to vector<8x128xf32>
    %11 = arith.addf %0, %10 : vector<8x128xf32>
    %c1_i32 = arith.constant 1 : i32
    %c0_2 = arith.constant 0 : index
    %c0_3 = arith.constant 0 : index
    %c0_4 = arith.constant 0 : index
    %12 = vector.load %arg3[%c0_2, %c0_3, %c0_4] : memref<1x8x128xf32, #tpu.memory_space<vmem>>, vector<1x8x128xf32>
    %13 = vector.shape_cast %12 : vector<1x8x128xf32> to vector<8x128xf32>
    %14 = vector.shape_cast %11 : vector<8x128xf32> to vector<1x8x128xf32>
    tpu.vector_store %arg3[%c0_2, %c0_3, %c0_4], %14 {strides = array<i32>} : memref<1x8x128xf32, #tpu.memory_space<vmem>>, vector<1x8x128xf32>,
    return
  }
  func.func @transform_0(%arg0: i32) -> (i32, i32) {
    %c0_i32 = arith.constant 0 : i32
    %c0_i32_0 = arith.constant 0 : i32
    return %arg0, %c0_i32 : i32, i32
  }
  func.func @transform_1(%arg0: i32) -> (i32, i32) {
    %c0_i32 = arith.constant 0 : i32
    %c0_i32_0 = arith.constant 0 : i32
    return %arg0, %c0_i32 : i32, i32
  }
  func.func @transform_2(%arg0: i32) -> (i32, i32, i32) {
    %c0_i32 = arith.constant 0 : i32
    %c0_i32_0 = arith.constant 0 : i32
    %c0_i32_1 = arith.constant 0 : i32
    return %arg0, %c0_i32, %c0_i32_0 : i32, i32, i32
  }
}

</mosaic_0001>

<llo_original>
// kernel: tpu_custom_call.1
$region0: #{tpu_custom_call.1}
  #allocation0 [shape = 'u32[]', space=smem, size = 0x4, offset = 0x4, fixed_abs, tag = 'smem constant byte address 0x4 - core index']
  #allocation1 [shape = 'u32[72,128]{1,0:T(1,128)}', space=vmem, size = 0x9000, scoped, tag = 'internal scratch']
  %s0 = inlined_call_operand.hbm [shape: f32[16,128], index: 0, kind: input, shape index: {}]
  %s1 = inlined_call_operand.hbm [shape: f32[16,128], index: 1, kind: input, shape index: {}]
  %s2 = inlined_call_operand.hbm [shape: f32[1,8,128], index: 2, kind: output, shape index: {}]
  %s3 = sld [smem:[#allocation0]]
  $region26: #{tpu_custom_call.1} parent=0
    _
  %s5 = ssub.s32 1, %s3
  %s6 = scalar_select 0, %s5, %s3
  $region1: #{tpu_custom_call.1} parent=0
    #allocation2 [shape = 'u8[8192]{0}', space=vmem, size = 0x2000, scoped, tag = 'input window, operand 0, single buffered']
    #allocation3 [shape = 's32[1]{0}', space=sflag, size = 0x4, scoped, tag = 'scoped memory for tpu_custom_call.1']
    #allocation4 [shape = 's32[1]{0}', space=sflag, size = 0x4, scoped, tag = 'scoped memory for tpu_custom_call.1']
    #allocation5 [shape = 'u8[8192]{0}', space=vmem, size = 0x2000, scoped, tag = 'input window, operand 1, single buffered']
    #allocation6 [shape = 's32[1]{0}', space=sflag, size = 0x4, scoped, tag = 'scoped memory for tpu_custom_call.1']
    #allocation7 [shape = 'u8[4096]{0}', space=vmem, size = 0x1000, scoped, tag = 'output window, operand 0, single buffered']
    %7 = vsyncpa [#allocation3], 0
    %8 = vsyncpa [#allocation6], 0
    %9 = vsyncpa [#allocation4], 0
    // Predicated region
    $region2: #{tpu_custom_call.1} parent=1 // pred_check
      _
    $region3: #{tpu_custom_call.1} parent=1 // pred_check_branch
      %11 = sbr.rel (0) target = $region5
    $region4: #{tpu_custom_call.1} parent=1 // pred_region
      %13 = vsyncadd [#allocation3], 0
      %s14 = sshll.u32 %s0, 4
      %s15 = int_to_ptr.hbm [resolvable:$true] %s14
      %s16 = sshll.u32 [#allocation2], 4
      %s17 = int_to_ptr.vmem [resolvable:$true] %s16
      %22 = dma.hbm_to_vmem [thread:$0]  %s15, 256, %s17, [#allocation3], 128, 128, 8
    $region5: #{tpu_custom_call.1} parent=1 // pred_fallthru
      _
    // Predicated region
    $region6: #{tpu_custom_call.1} parent=1 // pred_check
      _
    $region7: #{tpu_custom_call.1} parent=1 // pred_check_branch
      %24 = sbr.rel (0) target = $region9
    $region8: #{tpu_custom_call.1} parent=1 // pred_region
      %26 = vsyncadd [#allocation6], 0
      %s27 = sshll.u32 %s1, 4
      %s28 = int_to_ptr.hbm [resolvable:$true] %s27
      %s29 = sshll.u32 [#allocation5], 4
      %s30 = int_to_ptr.vmem [resolvable:$true] %s29
      %35 = dma.hbm_to_vmem [thread:$0]  %s28, 256, %s30, [#allocation6], 128, 128, 8
    $region9: #{tpu_custom_call.1} parent=1 // pred_fallthru
      _
    // Predicated region
    $region10: #{tpu_custom_call.1} parent=1 // pred_check
      _
    $region11: #{tpu_custom_call.1} parent=1 // pred_check_branch
      %37 = sbr.rel (0) target = $region13
    $region12: #{tpu_custom_call.1} parent=1 // pred_region
      %39 = dma.done [#allocation3], 256
    $region13: #{tpu_custom_call.1} parent=1 // pred_fallthru
      _
    // Predicated region
    $region14: #{tpu_custom_call.1} parent=1 // pred_check
      _
    $region15: #{tpu_custom_call.1} parent=1 // pred_check_branch
      %41 = sbr.rel (0) target = $region17
    $region16: #{tpu_custom_call.1} parent=1 // pred_region
      %43 = dma.done [#allocation6], 256
    $region17: #{tpu_custom_call.1} parent=1 // pred_fallthru
      _
    %v44 = vld [vmem:[#allocation2] sm:$0xff]
    %v45 = vld [vmem:[#allocation2 + $0x8] sm:$0xff]
    %v46 = vld [vmem:[#allocation5] sm:$0xff]
    %v47 = vld [vmem:[#allocation5 + $0x8] sm:$0xff]
    %v48 = vsub.f32 %v44, %v46
    %v49 = vsub.f32 %v45, %v47
    %v50 = vmul.f32 %v48, %v48
    %v51 = vmul.f32 %v49, %v49
    %v52 = vadd.f32 %v50, %v51
    %v53 = vadd.f32 %v52, 0.0
    %54 = vst [vmem:[#allocation7] sm:$0xff] %v53
    // Predicated region
    $region18: #{tpu_custom_call.1} parent=1 // pred_check
      _
    $region19: #{tpu_custom_call.1} parent=1 // pred_check_branch
      %56 = sbr.rel (0) target = $region21
    $region20: #{tpu_custom_call.1} parent=1 // pred_region
      %58 = vsyncadd [#allocation4], 0
      %s60 = sshll.u32 [#allocation7], 4
      %s61 = int_to_ptr.vmem [resolvable:$true] %s60
      %s62 = sshll.u32 %s2, 4
      %s63 = int_to_ptr.hbm [resolvable:$true] %s62
      %65 = dma.vmem_to_hbm [thread:$0]  %s61, 128, %s63, [#allocation4]
    $region21: #{tpu_custom_call.1} parent=1 // pred_fallthru
      _
    // Predicated region
    $region22: #{tpu_custom_call.1} parent=1 // pred_check
      _
    $region23: #{tpu_custom_call.1} parent=1 // pred_check_branch
      %67 = sbr.rel (0) target = $region25
    $region24: #{tpu_custom_call.1} parent=1 // pred_region
      %69 = dma.done [#allocation4], 128
    $region25: #{tpu_custom_call.1} parent=1 // pred_fallthru
      _
    %70 = vsyncpa [#allocation3], 1
    %71 = vsyncpa [#allocation6], 1
    %72 = vsyncpa [#allocation4], 1

</llo_original>
